<compile_context>
chip_gen: v7x
topology: tpu7x:2x2x1
jax: 0.10.0
libtpu: 0.0.40
codegen_flags: <defaults>
</compile_context>

<pallas_src>
import functools
import math

import jax
import jax.numpy as jnp
from jax.experimental import pallas as pl
from jax.experimental.pallas import tpu as pltpu


_VMEM_LIMIT = 64 * 1024 * 1024  # raise scoped VMEM above the 16/32 MiB defaults


def _tile(n, cap):
    """Full dim if small (always legal), else a cap that is a multiple of 8/128."""
    return n if n <= cap else cap


# --------------------------- Linear: y = x @ W^T -----------------------------

def _linear_kernel(x_ref, wt_ref, o_ref):
    o_ref[...] = jnp.dot(
        x_ref[...], wt_ref[...], preferred_element_type=jnp.float32
    ).astype(o_ref.dtype)


def linear(x2d, w, *, row_cap=256, col_cap=512):
    """x2d: (N, d_in); w: (d_out, d_in) (torch layout). Returns (N, d_out)."""
    n, d_in = x2d.shape
    d_out = w.shape[0]
    wt = w.T  # (d_in, d_out)

    rt = _tile(n, row_cap)       # large row tiles amortize per-grid-step overhead
    ct = _tile(d_out, col_cap)   # lane-dense output blocks
    grid = (pl.cdiv(n, rt), pl.cdiv(d_out, ct))  # ragged tails: OOB rows/cols discarded on store

    cost = pl.CostEstimate(
        flops=int(2 * n * d_in * d_out),
        transcendentals=0,
        bytes_accessed=int((n * d_in + d_in * d_out + n * d_out) * x2d.dtype.itemsize),
    )
    return pl.pallas_call(
        _linear_kernel,
        out_shape=jax.ShapeDtypeStruct((n, d_out), x2d.dtype),
        grid_spec=pltpu.PrefetchScalarGridSpec(
            num_scalar_prefetch=0,
            grid=grid,
            in_specs=[
                pl.BlockSpec((rt, d_in), lambda i, j: (i, 0)),
                pl.BlockSpec((d_in, ct), lambda i, j: (0, j)),
            ],
            out_specs=pl.BlockSpec((rt, ct), lambda i, j: (i, j)),
        ),
        compiler_params=pltpu.CompilerParams(
            dimension_semantics=("parallel", "parallel"),
            vmem_limit_bytes=_VMEM_LIMIT,
        ),
        cost_estimate=cost,
    )(x2d, wt)


# ---------------- Fused causal flash-attention with in-kernel RoPE -----------

def _dot_nt(a, b):
    # a: (m, d), b: (n, d) -> (m, n), contraction on the last dim (no explicit transpose)
    return jax.lax.dot_general(a, b, (((1,), (1,)), ((), ())),
                               preferred_element_type=jnp.float32)


def _flash_rope_kernel(q_ref, k_ref, v_ref, cq_ref, sq_ref, ck_ref, sk_ref,
                       o_ref, m_scr, l_scr, acc_scr,
                       *, scale, seq_len, block_q, block_k):
    qi = pl.program_id(1)
    ki = pl.program_id(2)

    @pl.when(ki == 0)
    def _():
        m_scr[...] = jnp.full(m_scr.shape, -jnp.inf, dtype=m_scr.dtype)
        l_scr[...] = jnp.zeros(l_scr.shape, dtype=l_scr.dtype)
        acc_scr[...] = jnp.zeros(acc_scr.shape, dtype=acc_scr.dtype)

    q = q_ref[...].astype(jnp.float32)   # (bq, d_k)   [head dim is de-interleaved]
    k = k_ref[...].astype(jnp.float32)   # (bk, d_k)
    v = v_ref[...].astype(jnp.float32)   # (bk, d_k)
    half = q.shape[-1] // 2

    cq, sq = cq_ref[...], sq_ref[...]    # (bq, d_k//2)
    ck, sk = ck_ref[...], sk_ref[...]    # (bk, d_k//2)

    # RoPE (rotate-half on the de-interleaved layout), fused as a split contraction:
    #   q_rot . k_rot^T == qr1.kr1^T + qr2.kr2^T
    q1, q2 = q[:, :half], q[:, half:]
    k1, k2 = k[:, :half], k[:, half:]
    qr1 = q1 * cq - q2 * sq
    qr2 = q2 * cq + q1 * sq
    kr1 = k1 * ck - k2 * sk
    kr2 = k2 * ck + k1 * sk

    s = (_dot_nt(qr1, kr1) + _dot_nt(qr2, kr2)) * scale      # (bq, bk)

    # causal + validity mask on absolute positions (handles ragged last blocks
    # without any HBM padding copies)
    q_pos = qi * block_q + jax.lax.broadcasted_iota(jnp.int32, s.shape, 0)
    k_pos = ki * block_k + jax.lax.broadcasted_iota(jnp.int32, s.shape, 1)
    valid = (q_pos >= k_pos) & (k_pos < seq_len)
    s = jnp.where(valid, s, -jnp.inf)

    m_prev = m_scr[...]
    m_new = jnp.maximum(m_prev, s.max(axis=-1, keepdims=True))
    alpha = jnp.exp(m_prev - m_new)
    p = jnp.exp(s - m_new)

    # zero out-of-range kv rows of V so garbage from a ragged block can't leak via 0*NaN
    kv_valid = (ki * block_k
                + jax.lax.broadcasted_iota(jnp.int32, (v.shape[0], 1), 0)) < seq_len
    v = jnp.where(kv_valid, v, 0.0)

    l_scr[...] = alpha * l_scr[...] + p.sum(axis=-1, keepdims=True)
    acc_scr[...] = alpha * acc_scr[...] + jnp.dot(p, v, preferred_element_type=jnp.float32)
    m_scr[...] = m_new

    @pl.when(ki == pl.num_programs(2) - 1)
    def _():
        o_ref[...] = (acc_scr[...] / l_scr[...]).astype(o_ref.dtype)


def flash_attention_rope(q, k, v, cos_h, sin_h, *, block_cap=256):
    """q,k,v: (B*H, S, d_k); cos_h/sin_h: (S, d_k//2). Causal attention with RoPE."""
    bh, s_len, d_k = q.shape
    bq = _tile(s_len, block_cap)
    bk = _tile(s_len, block_cap)
    grid = (bh, pl.cdiv(s_len, bq), pl.cdiv(s_len, bk))
    scale = 1.0 / math.sqrt(d_k)

    kernel = functools.partial(_flash_rope_kernel, scale=scale, seq_len=s_len,
                               block_q=bq, block_k=bk)
    cost = pl.CostEstimate(
        flops=int(4 * bh * s_len * s_len * d_k),
        transcendentals=int(bh * s_len * s_len),
        bytes_accessed=int(4 * bh * s_len * d_k * q.dtype.itemsize),
    )
    return pl.pallas_call(
        kernel,
        out_shape=jax.ShapeDtypeStruct((bh, s_len, d_k), q.dtype),
        grid_spec=pltpu.PrefetchScalarGridSpec(
            num_scalar_prefetch=0,
            grid=grid,
            in_specs=[
                pl.BlockSpec((None, bq, d_k), lambda b, i, j: (b, i, 0)),
                pl.BlockSpec((None, bk, d_k), lambda b, i, j: (b, j, 0)),
                pl.BlockSpec((None, bk, d_k), lambda b, i, j: (b, j, 0)),
                pl.BlockSpec((bq, d_k // 2), lambda b, i, j: (i, 0)),
                pl.BlockSpec((bq, d_k // 2), lambda b, i, j: (i, 0)),
                pl.BlockSpec((bk, d_k // 2), lambda b, i, j: (j, 0)),
                pl.BlockSpec((bk, d_k // 2), lambda b, i, j: (j, 0)),
            ],
            out_specs=pl.BlockSpec((None, bq, d_k), lambda b, i, j: (b, i, 0)),
            scratch_shapes=[
                pltpu.VMEM((bq, 1), jnp.float32),     # running max
                pltpu.VMEM((bq, 1), jnp.float32),     # running denom
                pltpu.VMEM((bq, d_k), jnp.float32),   # output accumulator
            ],
        ),
        compiler_params=pltpu.CompilerParams(
            dimension_semantics=("parallel", "parallel", "arbitrary"),
            vmem_limit_bytes=_VMEM_LIMIT,
        ),
        cost_estimate=cost,
    )(q, k, v, cos_h, sin_h, cos_h, sin_h)


# ------------------------------ MHA wrapper ----------------------------------

def _deinterleave_perm(num_heads, d_k):
    per_head = list(range(0, d_k, 2)) + list(range(1, d_k, 2))
    idx = [h * d_k + i for h in range(num_heads) for i in per_head]
    return jnp.asarray(idx, dtype=jnp.int32)


def multi_head_attention(x, wq, wk, wv, wo, *, num_heads, theta=None,
                         token_positions=None):
    """x: (..., seq, d_model); w*: (d_out, d_in) torch-layout weights."""
    # TODO(synk): only the default token_positions (= arange(seq)) path is implemented;
    # custom positions would index the cos/sin tables per batch in the wrapper.
    assert token_positions is None
    *lead, s_len, d_model = x.shape
    h = num_heads
    d_k = d_model // h
    assert d_k * h == d_model and d_k % 2 == 0

    batch = 1
    for dim in lead:
        batch *= dim
    x2d = x.reshape(batch * s_len, d_model)

    if theta is not None:
        perm = _deinterleave_perm(h, d_k)
        wq_u, wk_u = wq[perm], wk[perm]   # de-interleave head features via weight rows
        inv = 1.0 / (theta ** (jnp.arange(0, d_k, 2, dtype=jnp.float32) / d_k))
        pos = jnp.arange(s_len, dtype=jnp.float32)
        freq = pos[:, None] * inv[None, :]            # (S, d_k//2)
        cos_h = jnp.cos(freq).astype(x.dtype)
        sin_h = jnp.sin(freq).astype(x.dtype)
    else:
        wq_u, wk_u = wq, wk
        cos_h = jnp.ones((s_len, d_k // 2), x.dtype)
        sin_h = jnp.zeros((s_len, d_k // 2), x.dtype)

    q = linear(x2d, wq_u)
    k = linear(x2d, wk_u)
    v = linear(x2d, wv)

    def to_heads(t):
        return t.reshape(batch, s_len, h, d_k).transpose(0, 2, 1, 3).reshape(batch * h, s_len, d_k)

    o = flash_attention_rope(to_heads(q), to_heads(k), to_heads(v), cos_h, sin_h)
    o = o.reshape(batch, h, s_len, d_k).transpose(0, 2, 1, 3).reshape(batch * s_len, d_model)
    out = linear(o, wo)
    return out.reshape(*lead, s_len, d_model)


# ------------------------------ Reference ------------------------------------

def _reference_mha(x, wq, wk, wv, wo, num_heads, theta):
    *lead, s_len, d_model = x.shape
    h = num_heads
    d_k = d_model // h
    q = jnp.einsum('...d,od->...o', x, wq)
    k = jnp.einsum('...d,od->...o', x, wk)
    v = jnp.einsum('...d,od->...o', x, wv)

    def split(t):
        return jnp.moveaxis(t.reshape(*lead, s_len, h, d_k), -2, -3)

    q, k, v = split(q), split(k), split(v)

    if theta is not None:
        inv = 1.0 / (theta ** (jnp.arange(0, d_k, 2, dtype=jnp.float32) / d_k))
        pos = jnp.arange(s_len, dtype=jnp.float32)
        freq = pos[:, None] * inv[None, :]
        cos, sin = jnp.cos(freq), jnp.sin(freq)

        def rope(t):
            te, to = t[..., 0::2], t[..., 1::2]
            oe = te * cos - to * sin
            oo = te * sin + to * cos
            return jnp.stack([oe, oo], axis=-1).reshape(t.shape)

        q, k = rope(q), rope(k)

    s = jnp.einsum('...qd,...kd->...qk', q, k) / math.sqrt(d_k)
    causal = jnp.tril(jnp.ones((s_len, s_len), dtype=bool))
    s = jnp.where(causal, s, -jnp.inf)
    p = jax.nn.softmax(s, axis=-1)
    o = jnp.einsum('...qk,...kd->...qd', p, v)
    o = jnp.moveaxis(o, -3, -2).reshape(*lead, s_len, d_model)
    return jnp.einsum('...d,od->...o', o, wo)


if __name__ == "__main__":
    batch, seq, d_model, num_heads = 2, 8, 32, 4
    theta = 10000.0

    key = jax.random.PRNGKey(0)
    kx, kq, kk, kv, ko = jax.random.split(key, 5)
    std = math.sqrt(2.0 / (d_model + d_model))
    x = jax.random.normal(kx, (batch, seq, d_model), dtype=jnp.float32)
    wq = std * jax.random.normal(kq, (d_model, d_model), dtype=jnp.float32)
    wk = std * jax.random.normal(kk, (d_model, d_model), dtype=jnp.float32)
    wv = std * jax.random.normal(kv, (d_model, d_model), dtype=jnp.float32)
    wo = std * jax.random.normal(ko, (d_model, d_model), dtype=jnp.float32)

    out = multi_head_attention(x, wq, wk, wv, wo, num_heads=num_heads, theta=theta)
    out = jax.block_until_ready(out)

    ref = _reference_mha(x, wq, wk, wv, wo, num_heads, theta)
    assert out.shape == x.shape and out.dtype == x.dtype
    err = float(jnp.max(jnp.abs(out - ref)))
    assert err < 1e-3, err
    print("KERNEL_OK")
</pallas_src>

<mosaic_0001>
module attributes {stable_mosaic.version = 11 : i64} {
  func.func @_linear_kernel(%arg0: i32, %arg1: i32, %arg2: memref<16x32xf32, #tpu.memory_space<vmem>>, %arg3: memref<32x32xf32, #tpu.memory_space<vmem>>, %arg4: memref<16x32xf32, #tpu.memory_space<vmem>>) attributes {dimension_semantics = [#tpu.dimension_semantics<parallel>, #tpu.dimension_semantics<parallel>], iteration_bounds = array<i64: 1, 1>, scalar_prefetch = 0 : i64, scratch_operands = 0 : i64, tpu.core_type = #tpu.core_type<tc>, window_params = [{transform_indices = @transform_0, window_bounds = array<i64: 16, 32>}, {transform_indices = @transform_1, window_bounds = array<i64: 32, 32>}, {transform_indices = @transform_2, window_bounds = array<i64: 16, 32>}]} {
    %c0 = arith.constant 0 : index
    %c0_0 = arith.constant 0 : index
    %0 = vector.load %arg2[%c0, %c0_0] : memref<16x32xf32, #tpu.memory_space<vmem>>, vector<16x32xf32>
    %c0_1 = arith.constant 0 : index
    %c0_2 = arith.constant 0 : index
    %1 = vector.load %arg3[%c0_1, %c0_2] : memref<32x32xf32, #tpu.memory_space<vmem>>, vector<32x32xf32>
    %cst = arith.constant dense<0.000000e+00> : vector<16x32xf32>
    %2 = tpu.matmul %0, %1, %cst {dimension_numbers = #tpu.dot_dimension_numbers<[1], [0], [0], [1], [0, 0, 1, 1], [], []>} : vector<16x32xf32>, vector<32x32xf32>, vector<16x32xf32> -> vector<16x32xf32>
    %c0_3 = arith.constant 0 : index
    %c0_4 = arith.constant 0 : index
    %3 = vector.load %arg4[%c0_3, %c0_4] : memref<16x32xf32, #tpu.memory_space<vmem>>, vector<16x32xf32>
    tpu.vector_store %arg4[%c0_3, %c0_4], %2 {strides = array<i32>} : memref<16x32xf32, #tpu.memory_space<vmem>>, vector<16x32xf32>,
    return
  }
  func.func @transform_0(%arg0: i32, %arg1: i32) -> (i32, i32) {
    %c0_i32 = arith.constant 0 : i32
    %c0_i32_0 = arith.constant 0 : i32
    return %arg0, %c0_i32 : i32, i32
  }
  func.func @transform_1(%arg0: i32, %arg1: i32) -> (i32, i32) {
    %c0_i32 = arith.constant 0 : i32
    %c0_i32_0 = arith.constant 0 : i32
    return %c0_i32, %arg1 : i32, i32
  }
  func.func @transform_2(%arg0: i32, %arg1: i32) -> (i32, i32) {
    %c0_i32 = arith.constant 0 : i32
    return %arg0, %arg1 : i32, i32
  }
}

</mosaic_0001>

<llo_original>
// kernel: tpu_custom_call.1
$region0: #{tpu_custom_call.1}
  #allocation0 [shape = 'u32[]', space=smem, size = 0x4, offset = 0x4, fixed_abs, tag = 'smem constant byte address 0x4 - core index']
  #allocation1 [shape = 'u32[144,128]{1,0:T(1,128)}', space=vmem, size = 0x12000, scoped, tag = 'internal scratch']
  %s0 = inlined_call_operand.hbm [shape: f32[16,32], index: 0, kind: input, shape index: {}]
  %s1 = inlined_call_operand.hbm [shape: f32[32,32], index: 1, kind: input, shape index: {}]
  %s2 = inlined_call_operand.hbm [shape: f32[16,32], index: 2, kind: output, shape index: {}]
  %s3 = sld [smem:[#allocation0]]
  $region26: #{tpu_custom_call.1} parent=0
    _
  %s5 = ssub.s32 1, %s3
  %s6 = scalar_select 0, %s5, %s3
  $region1: #{tpu_custom_call.1} parent=0
    #allocation2 [shape = 'u8[8192]{0}', space=vmem, size = 0x2000, scoped, tag = 'input window, operand 0, single buffered']
    #allocation3 [shape = 's32[1]{0}', space=sflag, size = 0x4, scoped, tag = 'scoped memory for tpu_custom_call.1']
    #allocation4 [shape = 's32[1]{0}', space=sflag, size = 0x4, scoped, tag = 'scoped memory for tpu_custom_call.1']
    #allocation5 [shape = 'u8[16384]{0}', space=vmem, size = 0x4000, scoped, tag = 'input window, operand 1, single buffered']
    #allocation6 [shape = 's32[1]{0}', space=sflag, size = 0x4, scoped, tag = 'scoped memory for tpu_custom_call.1']
    #allocation7 [shape = 'u8[8192]{0}', space=vmem, size = 0x2000, scoped, tag = 'output window, operand 0, single buffered']
    %7 = vsyncpa [#allocation3], 0
    %8 = vsyncpa [#allocation6], 0
    %9 = vsyncpa [#allocation4], 0
    // Predicated region
    $region2: #{tpu_custom_call.1} parent=1 // pred_check
      _
    $region3: #{tpu_custom_call.1} parent=1 // pred_check_branch
      %11 = sbr.rel (0) target = $region5
    $region4: #{tpu_custom_call.1} parent=1 // pred_region
      %s13 = ssub.s32 256, 256
      %14 = vsyncadd [#allocation3], %s13
      %s15 = sshll.u32 [#allocation2], 4
      %s16 = int_to_ptr.vmem [resolvable:$true] %s15
      %21 = dma.hbm_to_vmem [thread:$0]  %s0, 256, %s16, [#allocation3], 128, 128, 8
    $region5: #{tpu_custom_call.1} parent=1 // pred_fallthru
      _
    // Predicated region
    $region6: #{tpu_custom_call.1} parent=1 // pred_check
      _
    $region7: #{tpu_custom_call.1} parent=1 // pred_check_branch
      %23 = sbr.rel (0) target = $region9
    $region8: #{tpu_custom_call.1} parent=1 // pred_region
      %s25 = ssub.s32 512, 512
      %26 = vsyncadd [#allocation6], %s25
      %s27 = sshll.u32 [#allocation5], 4
      %s28 = int_to_ptr.vmem [resolvable:$true] %s27
      %33 = dma.hbm_to_vmem [thread:$0]  %s1, 512, %s28, [#allocation6], 128, 128, 8
    $region9: #{tpu_custom_call.1} parent=1 // pred_fallthru
      _
    // Predicated region
    $region10: #{tpu_custom_call.1} parent=1 // pred_check
      _
    $region11: #{tpu_custom_call.1} parent=1 // pred_check_branch
      %35 = sbr.rel (0) target = $region13
    $region12: #{tpu_custom_call.1} parent=1 // pred_region
      %36 = dma.done [#allocation3], 256
    $region13: #{tpu_custom_call.1} parent=1 // pred_fallthru
      _
    // Predicated region
    $region14: #{tpu_custom_call.1} parent=1 // pred_check
      _
    $region15: #{tpu_custom_call.1} parent=1 // pred_check_branch
      %38 = sbr.rel (0) target = $region17
    $region16: #{tpu_custom_call.1} parent=1 // pred_region
      %39 = dma.done [#allocation6], 512
    $region17: #{tpu_custom_call.1} parent=1 // pred_fallthru
      _
    %v40 = vld [vmem:[#allocation2] sm:$0xff]
    %v41 = vld [vmem:[#allocation2 + $0x8] sm:$0xff]
    %v42 = vld [vmem:[#allocation5] sm:$0xff]
    %v43 = vld [vmem:[#allocation5 + $0x8] sm:$0xff]
    %v44 = vld [vmem:[#allocation5 + $0x10] sm:$0xff]
    %v45 = vld [vmem:[#allocation5 + $0x18] sm:$0xff]
    %vm46 = vcmask 261120
    %v48 = vsel %vm46, %v40, 0
    %v51 = vsel %vm46, %v41, 0
    %53 = vmatprep.subr.mxu0 0.0
    %54 = vmatpush1.msra.mxu0 %v42
    %55 = vmatprep.subr.mxu0 0.0
    %56 = vmatpush1.msra.mxu0 %v43
    %57 = vmatprep.subr.mxu0 0.0
    %58 = vmatpush1.msra.mxu0 %v44
    %59 = vmatprep.subr.mxu0 0.0
    %60 = vmatpush1.msra.mxu0 %v45
    %61 = vmatprep.subr.mxu0 0.0
    %62 = vmatpush1.msra.mxu0 0.0
    %63 = vmatprep.subr.mxu0 0.0
    %64 = vmatpush1.msra.mxu0 0.0
    %65 = vmatprep.subr.mxu0 0.0
    %66 = vmatpush1.msra.mxu0 0.0
    %67 = vmatprep.subr.mxu0 0.0
    %68 = vmatpush1.msra.mxu0 0.0
    %69 = vmatprep.subr.mxu0 0.0
    %70 = vmatpush1.msra.mxu0 0.0
    %71 = vmatprep.subr.mxu0 0.0
    %72 = vmatpush1.msra.mxu0 0.0
    %73 = vmatprep.subr.mxu0 0.0
    %74 = vmatpush1.msra.mxu0 0.0
    %75 = vmatprep.subr.mxu0 0.0
    %76 = vmatpush1.msra.mxu0 0.0
    %77 = vmatprep.subr.mxu0 0.0
    %78 = vmatpush1.msra.mxu0 0.0
    %79 = vmatprep.subr.mxu0 0.0
    %80 = vmatpush1.msra.mxu0 0.0
    %81 = vmatprep.subr.mxu0 0.0
    %82 = vmatpush1.msra.mxu0 0.0
    %83 = vmatprep.subr.mxu0 0.0
    %84 = vmatpush1.msra.mxu0 0.0
    %85 = vmatprep.subr.mxu0 0.0
    %86 = vmatpush1.msra.mxu0 0.0
    %87 = vmatprep.subr.mxu0 0.0
    %88 = vmatpush1.msra.mxu0 0.0
    %89 = vmatprep.subr.mxu0 0.0
    %90 = vmatpush1.msra.mxu0 0.0
    %91 = vmatprep.subr.mxu0 0.0
    %92 = vmatpush1.msra.mxu0 0.0
    %93 = vmatprep.subr.mxu0 0.0
    %94 = vmatpush1.msra.mxu0 0.0
    %95 = vmatprep.subr.mxu0 0.0
    %96 = vmatpush1.msra.mxu0 0.0
    %97 = vmatprep.subr.mxu0 0.0
    %98 = vmatpush1.msra.mxu0 0.0
    %99 = vmatprep.subr.mxu0 0.0
    %100 = vmatpush1.msra.mxu0 0.0
    %101 = vmatprep.subr.mxu0 0.0
    %102 = vmatpush1.msra.mxu0 0.0
    %103 = vmatprep.subr.mxu0 0.0
    %104 = vmatpush1.msra.mxu0 0.0
    %105 = vmatprep.subr.mxu0 0.0
    %106 = vmatpush1.msra.mxu0 0.0
    %107 = vmatprep.subr.mxu0 0.0
    %108 = vmatpush1.msra.mxu0 0.0
    %109 = vmatprep.subr.mxu0 0.0
    %110 = vmatpush1.msra.mxu0 0.0
    %111 = vmatprep.subr.mxu0 0.0
    %112 = vmatpush1.msra.mxu0 0.0
    %113 = vmatprep.subr.mxu0 0.0
    %114 = vmatpush1.msra.mxu0 0.0
    %115 = vmatprep.subr.mxu0 0.0
    %116 = vmatpush1.msra.mxu0 0.0
    %117 = vmatprep.mubr.f32.mxu0 0.0
    %118 = vmatmul.mubr.f32.gmra.mrb[0].mxu0 %v48
    %v119 = vpop.f32.mrb[0].mxu0
    %v120 = vadd.f32 0.0, %v119
    %v121 = vpop.f32.mrb[0].mxu0
    %122 = vmatprep.mubr.f32.mxu0 0.0
    %123 = vmatmul.mubr.f32.gmra.mrb[0].mxu0 %v51
    %v124 = vpop.f32.mrb[0].mxu0
    %v125 = vadd.f32 0.0, %v124
    %v126 = vpop.f32.mrb[0].mxu0
    %127 = vdwg.mxu0
    %128 = vst.msk [vmem:[#allocation7] sm:$0xff] %vm46, %v120
    %129 = vst.msk [vmem:[#allocation7 + $0x8] sm:$0xff] %vm46, %v125
    // Predicated region
    $region18: #{tpu_custom_call.1} parent=1 // pred_check
      _
    $region19: #{tpu_custom_call.1} parent=1 // pred_check_branch
      %131 = sbr.rel (0) target = $region21
    $region20: #{tpu_custom_call.1} parent=1 // pred_region
      %s133 = ssub.s32 256, 256
      %134 = vsyncadd [#allocation4], %s133
      %s135 = sshll.u32 [#allocation7], 4
      %s136 = int_to_ptr.vmem [resolvable:$true] %s135
      %141 = dma.vmem_to_hbm [thread:$0]  %s136, 256, %s2, [#allocation4], 128, 128, 8
    $region21: #{tpu_custom_call.1} parent=1 // pred_fallthru
      _
    // Predicated region
    $region22: #{tpu_custom_call.1} parent=1 // pred_check
      _
    $region23: #{tpu_custom_call.1} parent=1 // pred_check_branch
      %143 = sbr.rel (0) target = $region25
    $region24: #{tpu_custom_call.1} parent=1 // pred_region
      %144 = dma.done [#allocation4], 256
    $region25: #{tpu_custom_call.1} parent=1 // pred_fallthru
      _
    %145 = vsyncpa [#allocation3], 1
    %146 = vsyncpa [#allocation6], 1
    %147 = vsyncpa [#allocation4], 1

</llo_original>
